<compile_context>
chip_gen: v7x
topology: tpu7x:2x2x1
jax: 0.10.0
libtpu: 0.0.40
codegen_flags: <defaults>
</compile_context>

<pallas_src>
import jax
import jax.numpy as jnp
from jax.experimental import pallas as pl
from jax.experimental.pallas import tpu as pltpu

C1 = 0.01 ** 2
C2 = 0.03 ** 2


def _ssim_kernel(x_ref, y_ref, o_ref):
    # x_ref / y_ref / o_ref: (TBC, H, W) float32 tiles (unpadded).
    _, H, W = o_ref.shape

    x = x_ref[...]
    y = y_ref[...]

    def vsum3(a):
        # 3-tap sum along H with 1-pixel reflection (reflected value = index 1
        # from each edge, matching nn.ReflectionPad2d(1)).
        a_up = jnp.concatenate([a[:, 1:2, :], a[:, 0:H - 1, :]], axis=1)       # a[i-1]
        a_dn = jnp.concatenate([a[:, 1:H, :], a[:, H - 2:H - 1, :]], axis=1)   # a[i+1]
        return a_up + a + a_dn

    def hsum3(a):
        # 3-tap sum along W with 1-pixel reflection.
        a_lf = jnp.concatenate([a[:, :, 1:2], a[:, :, 0:W - 1]], axis=2)       # a[j-1]
        a_rt = jnp.concatenate([a[:, :, 1:W], a[:, :, W - 2:W - 1]], axis=2)   # a[j+1]
        return a_lf + a + a_rt

    inv9 = jnp.float32(1.0 / 9.0)

    def pool3x3(a):
        # Separable 3x3 stride-1 average pool with reflection border.
        return hsum3(vsum3(a)) * inv9

    mu_x = pool3x3(x)
    mu_y = pool3x3(y)
    e_xx = pool3x3(x * x)
    e_yy = pool3x3(y * y)
    e_xy = pool3x3(x * y)

    mu_xx = mu_x * mu_x
    mu_yy = mu_y * mu_y
    mu_xy = mu_x * mu_y

    sigma_x = e_xx - mu_xx
    sigma_y = e_yy - mu_yy
    sigma_xy = e_xy - mu_xy

    ssim_n = (2.0 * mu_xy + C1) * (2.0 * sigma_xy + C2)
    ssim_d = (mu_xx + mu_yy + C1) * (sigma_x + sigma_y + C2)

    loss = (1.0 - ssim_n * pl.reciprocal(ssim_d, approx=False)) * 0.5
    o_ref[...] = jnp.clip(loss, 0.0, 1.0)


def _choose_tbc(n, h, w, target_bytes=512 * 1024):
    """Channel-batch per block: biggest divisor of n whose tile fits the budget,
    preferring >= 2 grid blocks so the grid can shard across TensorCores."""
    per_slice = h * w * 4  # f32 bytes per (H, W) slice
    max_tbc = max(1, target_bytes // per_slice)
    divisors = [d for d in range(1, n + 1) if n % d == 0]
    fits = [d for d in divisors if d <= max_tbc]
    tbc = max(fits) if fits else 1
    if tbc == n and n > 1:
        smaller = [d for d in fits if d <= n // 2]
        if smaller:
            tbc = max(smaller)
    return tbc


@jax.jit
def ssim_pallas(x, y):
    """x, y: (B, C, H, W) float32. Returns (B, C, H, W) SSIM loss map."""
    B, C, H, W = x.shape
    assert H >= 2 and W >= 2, "ReflectionPad2d(1) requires H, W >= 2"
    N = B * C

    xf = x.reshape(N, H, W).astype(jnp.float32)
    yf = y.reshape(N, H, W).astype(jnp.float32)

    tbc = _choose_tbc(N, H, W)
    grid = (N // tbc,)

    out = pl.pallas_call(
        _ssim_kernel,
        out_shape=jax.ShapeDtypeStruct((N, H, W), jnp.float32),
        grid=grid,
        in_specs=[
            pl.BlockSpec((tbc, H, W), lambda i: (i, 0, 0)),
            pl.BlockSpec((tbc, H, W), lambda i: (i, 0, 0)),
        ],
        out_specs=pl.BlockSpec((tbc, H, W), lambda i: (i, 0, 0)),
        compiler_params=pltpu.CompilerParams(
            dimension_semantics=("parallel",)
        ),
    )(xf, yf)
    return out.reshape(B, C, H, W)


def ssim_ref(x, y):
    """Pure-JAX reference mirroring the PyTorch module."""
    pad_cfg = ((0, 0), (0, 0), (1, 1), (1, 1))
    xp = jnp.pad(x, pad_cfg, mode="reflect")
    yp = jnp.pad(y, pad_cfg, mode="reflect")

    def pool(a):
        s = jax.lax.reduce_window(
            a, 0.0, jax.lax.add,
            window_dimensions=(1, 1, 3, 3),
            window_strides=(1, 1, 1, 1),
            padding="VALID",
        )
        return s / 9.0

    mu_x = pool(xp)
    mu_y = pool(yp)
    sigma_x = pool(xp * xp) - mu_x ** 2
    sigma_y = pool(yp * yp) - mu_y ** 2
    sigma_xy = pool(xp * yp) - mu_x * mu_y
    n = (2 * mu_x * mu_y + C1) * (2 * sigma_xy + C2)
    d = (mu_x ** 2 + mu_y ** 2 + C1) * (sigma_x + sigma_y + C2)
    return jnp.clip((1 - n / d) / 2, 0.0, 1.0)


if __name__ == "__main__":
    key = jax.random.PRNGKey(0)
    kx, ky = jax.random.split(key)
    B, C, H, W = 2, 4, 16, 16
    x = jax.random.uniform(kx, (B, C, H, W), dtype=jnp.float32)
    y = jax.random.uniform(ky, (B, C, H, W), dtype=jnp.float32)

    out = jax.block_until_ready(ssim_pallas(x, y))
    ref = jax.block_until_ready(ssim_ref(x, y))

    assert out.shape == (B, C, H, W)
    assert jnp.allclose(out, ref, atol=2e-5, rtol=2e-5), "mismatch vs JAX reference"

    print("KERNEL_OK")
</pallas_src>

<mosaic_0001>
module attributes {stable_mosaic.version = 11 : i64} {
  func.func @_ssim_kernel(%arg0: i32, %arg1: memref<4x16x16xf32, #tpu.memory_space<vmem>>, %arg2: memref<4x16x16xf32, #tpu.memory_space<vmem>>, %arg3: memref<4x16x16xf32, #tpu.memory_space<vmem>>) attributes {dimension_semantics = [#tpu.dimension_semantics<parallel>], iteration_bounds = array<i64: 2>, scalar_prefetch = 0 : i64, scratch_operands = 0 : i64, tpu.core_type = #tpu.core_type<tc>, window_params = [{transform_indices = @transform_0, window_bounds = array<i64: 4, 16, 16>}, {transform_indices = @transform_1, window_bounds = array<i64: 4, 16, 16>}, {transform_indices = @transform_2, window_bounds = array<i64: 4, 16, 16>}]} {
    %c0 = arith.constant 0 : index
    %c0_0 = arith.constant 0 : index
    %c0_1 = arith.constant 0 : index
    %0 = vector.load %arg1[%c0, %c0_0, %c0_1] : memref<4x16x16xf32, #tpu.memory_space<vmem>>, vector<4x16x16xf32>
    %c0_2 = arith.constant 0 : index
    %c0_3 = arith.constant 0 : index
    %c0_4 = arith.constant 0 : index
    %1 = vector.load %arg2[%c0_2, %c0_3, %c0_4] : memref<4x16x16xf32, #tpu.memory_space<vmem>>, vector<4x16x16xf32>
    %2 = vector.extract_strided_slice %0 {offsets = [0, 1, 0], sizes = [4, 1, 16], strides = [1, 1, 1]} : vector<4x16x16xf32> to vector<4x1x16xf32>
    %3 = vector.extract_strided_slice %0 {offsets = [0, 0, 0], sizes = [4, 15, 16], strides = [1, 1, 1]} : vector<4x16x16xf32> to vector<4x15x16xf32>
    %4 = tpu.concatenate %2, %3 in 1 : vector<4x1x16xf32>, vector<4x15x16xf32> -> vector<4x16x16xf32>
    %5 = vector.extract_strided_slice %0 {offsets = [0, 1, 0], sizes = [4, 15, 16], strides = [1, 1, 1]} : vector<4x16x16xf32> to vector<4x15x16xf32>
    %6 = vector.extract_strided_slice %0 {offsets = [0, 14, 0], sizes = [4, 1, 16], strides = [1, 1, 1]} : vector<4x16x16xf32> to vector<4x1x16xf32>
    %7 = tpu.concatenate %5, %6 in 1 : vector<4x15x16xf32>, vector<4x1x16xf32> -> vector<4x16x16xf32>
    %8 = arith.addf %4, %0 : vector<4x16x16xf32>
    %9 = arith.addf %8, %7 : vector<4x16x16xf32>
    %10 = vector.extract_strided_slice %9 {offsets = [0, 0, 1], sizes = [4, 16, 1], strides = [1, 1, 1]} : vector<4x16x16xf32> to vector<4x16x1xf32>
    %11 = vector.extract_strided_slice %9 {offsets = [0, 0, 0], sizes = [4, 16, 15], strides = [1, 1, 1]} : vector<4x16x16xf32> to vector<4x16x15xf32>
    %12 = tpu.concatenate %10, %11 in 2 : vector<4x16x1xf32>, vector<4x16x15xf32> -> vector<4x16x16xf32>
    %13 = vector.extract_strided_slice %9 {offsets = [0, 0, 1], sizes = [4, 16, 15], strides = [1, 1, 1]} : vector<4x16x16xf32> to vector<4x16x15xf32>
    %14 = vector.extract_strided_slice %9 {offsets = [0, 0, 14], sizes = [4, 16, 1], strides = [1, 1, 1]} : vector<4x16x16xf32> to vector<4x16x1xf32>
    %15 = tpu.concatenate %13, %14 in 2 : vector<4x16x15xf32>, vector<4x16x1xf32> -> vector<4x16x16xf32>
    %16 = arith.addf %12, %9 : vector<4x16x16xf32>
    %17 = arith.addf %16, %15 : vector<4x16x16xf32>
    %cst = arith.constant 0.111111112 : f32
    %18 = vector.broadcast %cst : f32 to vector<4x16x16xf32>
    %19 = arith.mulf %17, %18 : vector<4x16x16xf32>
    %20 = vector.extract_strided_slice %1 {offsets = [0, 1, 0], sizes = [4, 1, 16], strides = [1, 1, 1]} : vector<4x16x16xf32> to vector<4x1x16xf32>
    %21 = vector.extract_strided_slice %1 {offsets = [0, 0, 0], sizes = [4, 15, 16], strides = [1, 1, 1]} : vector<4x16x16xf32> to vector<4x15x16xf32>
    %22 = tpu.concatenate %20, %21 in 1 : vector<4x1x16xf32>, vector<4x15x16xf32> -> vector<4x16x16xf32>
    %23 = vector.extract_strided_slice %1 {offsets = [0, 1, 0], sizes = [4, 15, 16], strides = [1, 1, 1]} : vector<4x16x16xf32> to vector<4x15x16xf32>
    %24 = vector.extract_strided_slice %1 {offsets = [0, 14, 0], sizes = [4, 1, 16], strides = [1, 1, 1]} : vector<4x16x16xf32> to vector<4x1x16xf32>
    %25 = tpu.concatenate %23, %24 in 1 : vector<4x15x16xf32>, vector<4x1x16xf32> -> vector<4x16x16xf32>
    %26 = arith.addf %22, %1 : vector<4x16x16xf32>
    %27 = arith.addf %26, %25 : vector<4x16x16xf32>
    %28 = vector.extract_strided_slice %27 {offsets = [0, 0, 1], sizes = [4, 16, 1], strides = [1, 1, 1]} : vector<4x16x16xf32> to vector<4x16x1xf32>
    %29 = vector.extract_strided_slice %27 {offsets = [0, 0, 0], sizes = [4, 16, 15], strides = [1, 1, 1]} : vector<4x16x16xf32> to vector<4x16x15xf32>
    %30 = tpu.concatenate %28, %29 in 2 : vector<4x16x1xf32>, vector<4x16x15xf32> -> vector<4x16x16xf32>
    %31 = vector.extract_strided_slice %27 {offsets = [0, 0, 1], sizes = [4, 16, 15], strides = [1, 1, 1]} : vector<4x16x16xf32> to vector<4x16x15xf32>
    %32 = vector.extract_strided_slice %27 {offsets = [0, 0, 14], sizes = [4, 16, 1], strides = [1, 1, 1]} : vector<4x16x16xf32> to vector<4x16x1xf32>
    %33 = tpu.concatenate %31, %32 in 2 : vector<4x16x15xf32>, vector<4x16x1xf32> -> vector<4x16x16xf32>
    %34 = arith.addf %30, %27 : vector<4x16x16xf32>
    %35 = arith.addf %34, %33 : vector<4x16x16xf32>
    %cst_5 = arith.constant 0.111111112 : f32
    %36 = vector.broadcast %cst_5 : f32 to vector<4x16x16xf32>
    %37 = arith.mulf %35, %36 : vector<4x16x16xf32>
    %38 = arith.mulf %0, %0 : vector<4x16x16xf32>
    %39 = vector.extract_strided_slice %38 {offsets = [0, 1, 0], sizes = [4, 1, 16], strides = [1, 1, 1]} : vector<4x16x16xf32> to vector<4x1x16xf32>
    %40 = vector.extract_strided_slice %38 {offsets = [0, 0, 0], sizes = [4, 15, 16], strides = [1, 1, 1]} : vector<4x16x16xf32> to vector<4x15x16xf32>
    %41 = tpu.concatenate %39, %40 in 1 : vector<4x1x16xf32>, vector<4x15x16xf32> -> vector<4x16x16xf32>
    %42 = vector.extract_strided_slice %38 {offsets = [0, 1, 0], sizes = [4, 15, 16], strides = [1, 1, 1]} : vector<4x16x16xf32> to vector<4x15x16xf32>
    %43 = vector.extract_strided_slice %38 {offsets = [0, 14, 0], sizes = [4, 1, 16], strides = [1, 1, 1]} : vector<4x16x16xf32> to vector<4x1x16xf32>
    %44 = tpu.concatenate %42, %43 in 1 : vector<4x15x16xf32>, vector<4x1x16xf32> -> vector<4x16x16xf32>
    %45 = arith.addf %41, %38 : vector<4x16x16xf32>
    %46 = arith.addf %45, %44 : vector<4x16x16xf32>
    %47 = vector.extract_strided_slice %46 {offsets = [0, 0, 1], sizes = [4, 16, 1], strides = [1, 1, 1]} : vector<4x16x16xf32> to vector<4x16x1xf32>
    %48 = vector.extract_strided_slice %46 {offsets = [0, 0, 0], sizes = [4, 16, 15], strides = [1, 1, 1]} : vector<4x16x16xf32> to vector<4x16x15xf32>
    %49 = tpu.concatenate %47, %48 in 2 : vector<4x16x1xf32>, vector<4x16x15xf32> -> vector<4x16x16xf32>
    %50 = vector.extract_strided_slice %46 {offsets = [0, 0, 1], sizes = [4, 16, 15], strides = [1, 1, 1]} : vector<4x16x16xf32> to vector<4x16x15xf32>
    %51 = vector.extract_strided_slice %46 {offsets = [0, 0, 14], sizes = [4, 16, 1], strides = [1, 1, 1]} : vector<4x16x16xf32> to vector<4x16x1xf32>
    %52 = tpu.concatenate %50, %51 in 2 : vector<4x16x15xf32>, vector<4x16x1xf32> -> vector<4x16x16xf32>
    %53 = arith.addf %49, %46 : vector<4x16x16xf32>
    %54 = arith.addf %53, %52 : vector<4x16x16xf32>
    %cst_6 = arith.constant 0.111111112 : f32
    %55 = vector.broadcast %cst_6 : f32 to vector<4x16x16xf32>
    %56 = arith.mulf %54, %55 : vector<4x16x16xf32>
    %57 = arith.mulf %1, %1 : vector<4x16x16xf32>
    %58 = vector.extract_strided_slice %57 {offsets = [0, 1, 0], sizes = [4, 1, 16], strides = [1, 1, 1]} : vector<4x16x16xf32> to vector<4x1x16xf32>
    %59 = vector.extract_strided_slice %57 {offsets = [0, 0, 0], sizes = [4, 15, 16], strides = [1, 1, 1]} : vector<4x16x16xf32> to vector<4x15x16xf32>
    %60 = tpu.concatenate %58, %59 in 1 : vector<4x1x16xf32>, vector<4x15x16xf32> -> vector<4x16x16xf32>
    %61 = vector.extract_strided_slice %57 {offsets = [0, 1, 0], sizes = [4, 15, 16], strides = [1, 1, 1]} : vector<4x16x16xf32> to vector<4x15x16xf32>
    %62 = vector.extract_strided_slice %57 {offsets = [0, 14, 0], sizes = [4, 1, 16], strides = [1, 1, 1]} : vector<4x16x16xf32> to vector<4x1x16xf32>
    %63 = tpu.concatenate %61, %62 in 1 : vector<4x15x16xf32>, vector<4x1x16xf32> -> vector<4x16x16xf32>
    %64 = arith.addf %60, %57 : vector<4x16x16xf32>
    %65 = arith.addf %64, %63 : vector<4x16x16xf32>
    %66 = vector.extract_strided_slice %65 {offsets = [0, 0, 1], sizes = [4, 16, 1], strides = [1, 1, 1]} : vector<4x16x16xf32> to vector<4x16x1xf32>
    %67 = vector.extract_strided_slice %65 {offsets = [0, 0, 0], sizes = [4, 16, 15], strides = [1, 1, 1]} : vector<4x16x16xf32> to vector<4x16x15xf32>
    %68 = tpu.concatenate %66, %67 in 2 : vector<4x16x1xf32>, vector<4x16x15xf32> -> vector<4x16x16xf32>
    %69 = vector.extract_strided_slice %65 {offsets = [0, 0, 1], sizes = [4, 16, 15], strides = [1, 1, 1]} : vector<4x16x16xf32> to vector<4x16x15xf32>
    %70 = vector.extract_strided_slice %65 {offsets = [0, 0, 14], sizes = [4, 16, 1], strides = [1, 1, 1]} : vector<4x16x16xf32> to vector<4x16x1xf32>
    %71 = tpu.concatenate %69, %70 in 2 : vector<4x16x15xf32>, vector<4x16x1xf32> -> vector<4x16x16xf32>
    %72 = arith.addf %68, %65 : vector<4x16x16xf32>
    %73 = arith.addf %72, %71 : vector<4x16x16xf32>
    %cst_7 = arith.constant 0.111111112 : f32
    %74 = vector.broadcast %cst_7 : f32 to vector<4x16x16xf32>
    %75 = arith.mulf %73, %74 : vector<4x16x16xf32>
    %76 = arith.mulf %0, %1 : vector<4x16x16xf32>
    %77 = vector.extract_strided_slice %76 {offsets = [0, 1, 0], sizes = [4, 1, 16], strides = [1, 1, 1]} : vector<4x16x16xf32> to vector<4x1x16xf32>
    %78 = vector.extract_strided_slice %76 {offsets = [0, 0, 0], sizes = [4, 15, 16], strides = [1, 1, 1]} : vector<4x16x16xf32> to vector<4x15x16xf32>
    %79 = tpu.concatenate %77, %78 in 1 : vector<4x1x16xf32>, vector<4x15x16xf32> -> vector<4x16x16xf32>
    %80 = vector.extract_strided_slice %76 {offsets = [0, 1, 0], sizes = [4, 15, 16], strides = [1, 1, 1]} : vector<4x16x16xf32> to vector<4x15x16xf32>
    %81 = vector.extract_strided_slice %76 {offsets = [0, 14, 0], sizes = [4, 1, 16], strides = [1, 1, 1]} : vector<4x16x16xf32> to vector<4x1x16xf32>
    %82 = tpu.concatenate %80, %81 in 1 : vector<4x15x16xf32>, vector<4x1x16xf32> -> vector<4x16x16xf32>
    %83 = arith.addf %79, %76 : vector<4x16x16xf32>
    %84 = arith.addf %83, %82 : vector<4x16x16xf32>
    %85 = vector.extract_strided_slice %84 {offsets = [0, 0, 1], sizes = [4, 16, 1], strides = [1, 1, 1]} : vector<4x16x16xf32> to vector<4x16x1xf32>
    %86 = vector.extract_strided_slice %84 {offsets = [0, 0, 0], sizes = [4, 16, 15], strides = [1, 1, 1]} : vector<4x16x16xf32> to vector<4x16x15xf32>
    %87 = tpu.concatenate %85, %86 in 2 : vector<4x16x1xf32>, vector<4x16x15xf32> -> vector<4x16x16xf32>
    %88 = vector.extract_strided_slice %84 {offsets = [0, 0, 1], sizes = [4, 16, 15], strides = [1, 1, 1]} : vector<4x16x16xf32> to vector<4x16x15xf32>
    %89 = vector.extract_strided_slice %84 {offsets = [0, 0, 14], sizes = [4, 16, 1], strides = [1, 1, 1]} : vector<4x16x16xf32> to vector<4x16x1xf32>
    %90 = tpu.concatenate %88, %89 in 2 : vector<4x16x15xf32>, vector<4x16x1xf32> -> vector<4x16x16xf32>
    %91 = arith.addf %87, %84 : vector<4x16x16xf32>
    %92 = arith.addf %91, %90 : vector<4x16x16xf32>
    %cst_8 = arith.constant 0.111111112 : f32
    %93 = vector.broadcast %cst_8 : f32 to vector<4x16x16xf32>
    %94 = arith.mulf %92, %93 : vector<4x16x16xf32>
    %95 = arith.mulf %19, %19 : vector<4x16x16xf32>
    %96 = arith.mulf %37, %37 : vector<4x16x16xf32>
    %97 = arith.mulf %19, %37 : vector<4x16x16xf32>
    %98 = arith.subf %56, %95 : vector<4x16x16xf32>
    %99 = arith.subf %75, %96 : vector<4x16x16xf32>
    %100 = arith.subf %94, %97 : vector<4x16x16xf32>
    %cst_9 = arith.constant 2.000000e+00 : f32
    %101 = vector.broadcast %cst_9 : f32 to vector<4x16x16xf32>
    %102 = arith.mulf %101, %97 : vector<4x16x16xf32>
    %cst_10 = arith.constant 9.99999974E-5 : f32
    %103 = vector.broadcast %cst_10 : f32 to vector<4x16x16xf32>
    %104 = arith.addf %102, %103 : vector<4x16x16xf32>
    %cst_11 = arith.constant 2.000000e+00 : f32
    %105 = vector.broadcast %cst_11 : f32 to vector<4x16x16xf32>
    %106 = arith.mulf %105, %100 : vector<4x16x16xf32>
    %cst_12 = arith.constant 8.99999984E-4 : f32
    %107 = vector.broadcast %cst_12 : f32 to vector<4x16x16xf32>
    %108 = arith.addf %106, %107 : vector<4x16x16xf32>
    %109 = arith.mulf %104, %108 : vector<4x16x16xf32>
    %110 = arith.addf %95, %96 : vector<4x16x16xf32>
    %cst_13 = arith.constant 9.99999974E-5 : f32
    %111 = vector.broadcast %cst_13 : f32 to vector<4x16x16xf32>
    %112 = arith.addf %110, %111 : vector<4x16x16xf32>
    %113 = arith.addf %98, %99 : vector<4x16x16xf32>
    %cst_14 = arith.constant 8.99999984E-4 : f32
    %114 = vector.broadcast %cst_14 : f32 to vector<4x16x16xf32>
    %115 = arith.addf %113, %114 : vector<4x16x16xf32>
    %116 = arith.mulf %112, %115 : vector<4x16x16xf32>
    %117 = tpu.reciprocal %116 : vector<4x16x16xf32> -> vector<4x16x16xf32>
    %118 = arith.mulf %109, %117 : vector<4x16x16xf32>
    %cst_15 = arith.constant 1.000000e+00 : f32
    %119 = vector.broadcast %cst_15 : f32 to vector<4x16x16xf32>
    %120 = arith.subf %119, %118 : vector<4x16x16xf32>
    %cst_16 = arith.constant 5.000000e-01 : f32
    %121 = vector.broadcast %cst_16 : f32 to vector<4x16x16xf32>
    %122 = arith.mulf %120, %121 : vector<4x16x16xf32>
    %cst_17 = arith.constant 0.000000e+00 : f32
    %cst_18 = arith.constant 1.000000e+00 : f32
    %123 = vector.broadcast %cst_17 : f32 to vector<4x16x16xf32>
    %124 = arith.maximumf %123, %122 : vector<4x16x16xf32>
    %125 = vector.broadcast %cst_18 : f32 to vector<4x16x16xf32>
    %126 = arith.minimumf %125, %124 : vector<4x16x16xf32>
    %c0_19 = arith.constant 0 : index
    %c0_20 = arith.constant 0 : index
    %c0_21 = arith.constant 0 : index
    %127 = vector.load %arg3[%c0_19, %c0_20, %c0_21] : memref<4x16x16xf32, #tpu.memory_space<vmem>>, vector<4x16x16xf32>
    tpu.vector_store %arg3[%c0_19, %c0_20, %c0_21], %126 {strides = array<i32>} : memref<4x16x16xf32, #tpu.memory_space<vmem>>, vector<4x16x16xf32>,
    return
  }
  func.func @transform_0(%arg0: i32) -> (i32, i32, i32) {
    %c0_i32 = arith.constant 0 : i32
    %c0_i32_0 = arith.constant 0 : i32
    %c0_i32_1 = arith.constant 0 : i32
    return %arg0, %c0_i32, %c0_i32_0 : i32, i32, i32
  }
  func.func @transform_1(%arg0: i32) -> (i32, i32, i32) {
    %c0_i32 = arith.constant 0 : i32
    %c0_i32_0 = arith.constant 0 : i32
    %c0_i32_1 = arith.constant 0 : i32
    return %arg0, %c0_i32, %c0_i32_0 : i32, i32, i32
  }
  func.func @transform_2(%arg0: i32) -> (i32, i32, i32) {
    %c0_i32 = arith.constant 0 : i32
    %c0_i32_0 = arith.constant 0 : i32
    %c0_i32_1 = arith.constant 0 : i32
    return %arg0, %c0_i32, %c0_i32_0 : i32, i32, i32
  }
}

</mosaic_0001>

<llo_original>
// kernel: ssim_pallas.1
$region0: #{ssim_pallas.1}
  #allocation0 [shape = 'u32[]', space=smem, size = 0x4, offset = 0x4, fixed_abs, tag = 'smem constant byte address 0x4 - core index']
  #allocation1 [shape = 'u32[144,128]{1,0:T(1,128)}', space=vmem, size = 0x12000, scoped, tag = 'internal scratch']
  %s0 = inlined_call_operand.hbm [shape: f32[8,16,16], index: 0, kind: input, shape index: {}]
  %s1 = inlined_call_operand.hbm [shape: f32[8,16,16], index: 1, kind: input, shape index: {}]
  %s2 = inlined_call_operand.hbm [shape: f32[8,16,16], index: 2, kind: output, shape index: {}]
  %s3 = sld [smem:[#allocation0]]
  $region49: #{ssim_pallas.1} parent=0
    _
  %s5 = ssub.s32 1, %s3
  %s6 = scalar_select 0, %s5, %s3
  $region1: #{ssim_pallas.1} parent=0
    #allocation2 [shape = 'u8[65536]{0}', space=vmem, size = 0x10000, scoped, tag = 'input window, operand 0']
    #allocation3 [shape = 's32[2]{0}', space=sflag, size = 0x8, scoped, tag = 'scoped memory for ssim_pallas.1']
    #allocation4 [shape = 's32[2]{0}', space=sflag, size = 0x8, scoped, tag = 'scoped memory for ssim_pallas.1']
    #allocation5 [shape = 'u8[65536]{0}', space=vmem, size = 0x10000, scoped, tag = 'input window, operand 1']
    #allocation6 [shape = 's32[2]{0}', space=sflag, size = 0x8, scoped, tag = 'scoped memory for ssim_pallas.1']
    #allocation7 [shape = 'u8[65536]{0}', space=vmem, size = 0x10000, scoped, tag = 'output window, operand 0']
    %7 = vsyncpa [#allocation3], 0
    %s8 = scalar_lea.sflag [#allocation3], 1
    %9 = vsyncpa %s8, 0
    %10 = vsyncpa [#allocation6], 0
    %s11 = scalar_lea.sflag [#allocation6], 1
    %12 = vsyncpa %s11, 0
    %13 = vsyncpa [#allocation4], 0
    %s14 = scalar_lea.sflag [#allocation4], 1
    %15 = vsyncpa %s14, 0
    loop: start=0, step=1, limit=4
    $region2: #{ssim_pallas.1} parent=1 // loop_pre_header
      _
    $region3: #{ssim_pallas.1} parent=1 // loop_header
      %s17 = sphi 0, %s21
      %p18 = scmp.ge.s32.totalorder %s17, 4
      %s27 = sphi 0, %s29
      %s30 = sphi 0, %s27
      %s31 = sphi 0, %s30
      %s47 = sphi 0, %s31
      %s53 = sphi 0, %s55
      %s56 = sphi 0, %s53
      %s57 = sphi 0, %s56
      %s73 = sphi 0, %s57
      %s79 = sphi 0, %s81
      %s82 = sphi 0, %s79
      %s83 = sphi 0, %s82
      %s99 = sphi 0, %s83
    $region4: #{ssim_pallas.1} parent=1 // loop_header_branch
      %20 = sbr.rel (%p18) target = $region8
    $region5: #{ssim_pallas.1} parent=1 // loop_body
      %s22 = ssub.s32 %s17, 1
      %s23 = ssub.s32 %s17, 2
      %s24 = sadd.s32 %s17, 1
      %s25 = ssub.s32 %s17, %s24
      %p26 = scmp.eq.s32.totalorder %s25, 0
      %s28 = sadd.s32 %s27, 1
      %s29 = scalar_select %p26, %s27, %s28
      %p32 = pneg %p26
      %p33 = scmp.eq.s32.totalorder %s17, 1
      %p34 = por %p32, %p33
      %p35 = scmp.ne.s32.totalorder %s27, %s30
      %p36 = scmp.eq.s32.totalorder %s17, 0
      %p37 = por %p35, %p36
      %p38 = scmp.ne.s32.totalorder %s27, %s30
      %p39 = scmp.eq.s32.totalorder %s22, 1
      %p40 = por %p38, %p39
      %p41 = scmp.ne.s32.totalorder %s30, %s31
      %p42 = scmp.eq.s32.totalorder %s22, 0
      %p43 = por %p41, %p42
      %p44 = scmp.ne.s32.totalorder %s30, %s31
      %p45 = scmp.eq.s32.totalorder %s23, 1
      %p46 = por %p44, %p45
      %p48 = scmp.ne.s32.totalorder %s31, %s47
      %p49 = scmp.eq.s32.totalorder %s23, 0
      %p50 = por %p48, %p49
      %s51 = ssub.s32 %s17, %s24
      %p52 = scmp.eq.s32.totalorder %s51, 0
      %s54 = sadd.s32 %s53, 1
      %s55 = scalar_select %p52, %s53, %s54
      %p58 = pneg %p52
      %p59 = scmp.eq.s32.totalorder %s17, 1
      %p60 = por %p58, %p59
      %p61 = scmp.ne.s32.totalorder %s53, %s56
      %p62 = scmp.eq.s32.totalorder %s17, 0
      %p63 = por %p61, %p62
      %p64 = scmp.ne.s32.totalorder %s53, %s56
      %p65 = scmp.eq.s32.totalorder %s22, 1
      %p66 = por %p64, %p65
      %p67 = scmp.ne.s32.totalorder %s56, %s57
      %p68 = scmp.eq.s32.totalorder %s22, 0
      %p69 = por %p67, %p68
      %p70 = scmp.ne.s32.totalorder %s56, %s57
      %p71 = scmp.eq.s32.totalorder %s23, 1
      %p72 = por %p70, %p71
      %p74 = scmp.ne.s32.totalorder %s57, %s73
      %p75 = scmp.eq.s32.totalorder %s23, 0
      %p76 = por %p74, %p75
      %s77 = ssub.s32 %s17, %s24
      %p78 = scmp.eq.s32.totalorder %s77, 0
      %s80 = sadd.s32 %s79, 1
      %s81 = scalar_select %p78, %s79, %s80
      %p84 = pneg %p78
      %p85 = scmp.eq.s32.totalorder %s17, 1
      %p86 = por %p84, %p85
      %p87 = scmp.ne.s32.totalorder %s79, %s82
      %p88 = scmp.eq.s32.totalorder %s17, 0
      %p89 = por %p87, %p88
      %p90 = scmp.ne.s32.totalorder %s79, %s82
      %p91 = scmp.eq.s32.totalorder %s22, 1
      %p92 = por %p90, %p91
      %p93 = scmp.ne.s32.totalorder %s82, %s83
      %p94 = scmp.eq.s32.totalorder %s22, 0
      %p95 = por %p93, %p94
      %p96 = scmp.ne.s32.totalorder %s82, %s83
      %p97 = scmp.eq.s32.totalorder %s23, 1
      %p98 = por %p96, %p97
      %p100 = scmp.ne.s32.totalorder %s83, %s99
      %p101 = scmp.eq.s32.totalorder %s23, 0
      %p102 = por %p100, %p101
      %p103 = scmp.le.s32.totalorder 1, %s17
      %p104 = scmp.lt.s32.totalorder %s17, 3
      %p105 = pnand %p103, %p104
      %p106 = pneg %p105
      // Predicated region
      $region9: #{ssim_pallas.1} parent=5 // pred_check
        _
      $region10: #{ssim_pallas.1} parent=5 // pred_check_branch
        %108 = sbr.rel (%p105) target = $region12
      $region11: #{ssim_pallas.1} parent=5 // pred_region
        %s109 = ssub.s32 %s17, 1
      $region12: #{ssim_pallas.1} parent=5 // pred_fallthru
        _
      %p110 = scmp.lt.s32.totalorder %s17, 2
      // Predicated region
      $region13: #{ssim_pallas.1} parent=5 // pred_check
        %p111 = pneg %p110
      $region14: #{ssim_pallas.1} parent=5 // pred_check_branch
        %113 = sbr.rel (%p111) target = $region16
      $region15: #{ssim_pallas.1} parent=5 // pred_region
        // Predicated region
        $region17: #{ssim_pallas.1} parent=15 // pred_check
          %p114 = pneg %p37
        $region18: #{ssim_pallas.1} parent=15 // pred_check_branch
          %116 = sbr.rel (%p114) target = $region20
        $region19: #{ssim_pallas.1} parent=15 // pred_region
          %s117 = sand.u32 %s27, 1
          %s118 = scalar_lea.sflag [#allocation3], %s117
          %s119 = sand.u32 %s27, 1
          %s120 = smul.addr %s119, 64
          %s121 = scalar_lea.vmem [#allocation2], %s120
          %s122 = smul.u32 4, %s17
          %s124 = ssub.s32 1024, 1024
          %125 = vsyncadd %s118, %s124
          %s126 = smul.addr %s122, 2
          %s127 = smul.addr %s126, 128
          %s128 = scalar_lea.hbm %s0, %s127
          %s129 = sshll.u32 %s121, 4
          %s130 = int_to_ptr.vmem [resolvable:$true] %s129
          %135 = dma.hbm_to_vmem [thread:$0]  %s128, 1024, %s130, %s118, 128, 128, 8
        $region20: #{ssim_pallas.1} parent=15 // pred_fallthru
          _
        // Predicated region
        $region21: #{ssim_pallas.1} parent=15 // pred_check
          %p136 = pneg %p63
        $region22: #{ssim_pallas.1} parent=15 // pred_check_branch
          %138 = sbr.rel (%p136) target = $region24
        $region23: #{ssim_pallas.1} parent=15 // pred_region
          %s139 = sand.u32 %s53, 1
          %s140 = scalar_lea.sflag [#allocation6], %s139
          %s141 = sand.u32 %s53, 1
          %s142 = smul.addr %s141, 64
          %s143 = scalar_lea.vmem [#allocation5], %s142
          %s144 = smul.u32 4, %s17
          %s146 = ssub.s32 1024, 1024
          %147 = vsyncadd %s140, %s146
          %s148 = smul.addr %s144, 2
          %s149 = smul.addr %s148, 128
          %s150 = scalar_lea.hbm %s1, %s149
          %s151 = sshll.u32 %s143, 4
          %s152 = int_to_ptr.vmem [resolvable:$true] %s151
          %157 = dma.hbm_to_vmem [thread:$0]  %s150, 1024, %s152, %s140, 128, 128, 8
        $region24: #{ssim_pallas.1} parent=15 // pred_fallthru
          _
      $region16: #{ssim_pallas.1} parent=5 // pred_fallthru
        _
      %p158 = scmp.le.s32.totalorder 1, %s17
      %p159 = scmp.lt.s32.totalorder %s17, 3
      %p160 = pnand %p158, %p159
      %p161 = pneg %p160
      // Predicated region
      $region25: #{ssim_pallas.1} parent=5 // pred_check
        _
      $region26: #{ssim_pallas.1} parent=5 // pred_check_branch
        %163 = sbr.rel (%p160) target = $region28
      $region27: #{ssim_pallas.1} parent=5 // pred_region
        %s164 = ssub.s32 %s17, 1
        %s165 = sand.u32 %s30, 1
        %s166 = scalar_lea.sflag [#allocation3], %s165
        %s167 = sand.u32 %s30, 1
        %s168 = smul.addr %s167, 64
        %s169 = scalar_lea.vmem [#allocation2], %s168
        // Predicated region
        $region29: #{ssim_pallas.1} parent=27 // pred_check
          %p170 = pneg %p43
        $region30: #{ssim_pallas.1} parent=27 // pred_check_branch
          %172 = sbr.rel (%p170) target = $region32
        $region31: #{ssim_pallas.1} parent=27 // pred_region
          %173 = dma.done %s166, 1024
        $region32: #{ssim_pallas.1} parent=27 // pred_fallthru
          _
        %s174 = sand.u32 %s56, 1
        %s175 = scalar_lea.sflag [#allocation6], %s174
        %s176 = sand.u32 %s56, 1
        %s177 = smul.addr %s176, 64
        %s178 = scalar_lea.vmem [#allocation5], %s177
        // Predicated region
        $region33: #{ssim_pallas.1} parent=27 // pred_check
          %p179 = pneg %p69
        $region34: #{ssim_pallas.1} parent=27 // pred_check_branch
          %181 = sbr.rel (%p179) target = $region36
        $region35: #{ssim_pallas.1} parent=27 // pred_region
          %182 = dma.done %s175, 1024
        $region36: #{ssim_pallas.1} parent=27 // pred_fallthru
          _
        %s183 = sand.u32 %s30, 1
        %s184 = scalar_lea.sflag [#allocation3], %s183
        %s185 = sand.u32 %s30, 1
        %s186 = smul.addr %s185, 64
        %s187 = scalar_lea.vmem [#allocation2], %s186
        %p188 = pneg %p43
        %p189 = pneg %p40
        %s190 = sand.u32 %s56, 1
        %s191 = scalar_lea.sflag [#allocation6], %s190
        %s192 = sand.u32 %s56, 1
        %s193 = smul.addr %s192, 64
        %s194 = scalar_lea.vmem [#allocation5], %s193
        %p195 = pneg %p69
        %p196 = pneg %p66
        %p197 = pneg %p95
        %p198 = pneg %p92
        %s199 = sand.u32 %s82, 1
        %s200 = scalar_lea.sflag [#allocation4], %s199
        %s201 = sand.u32 %s82, 1
        %s202 = smul.addr %s201, 64
        %s203 = scalar_lea.vmem [#allocation7], %s202
        %s204 = smul.u32 4, %s22
        %s205 = smul.u32 4, %s22
        %s206 = smul.u32 4, %s22
        %v207 = vld [vmem:[%s169] sm:$0xff]
        %v208 = vld [vmem:[%s169 + $0x8] sm:$0xff]
        %v209 = vld [vmem:[%s169 + $0x10] sm:$0xff]
        %v210 = vld [vmem:[%s169 + $0x18] sm:$0xff]
        %v211 = vld [vmem:[%s169 + $0x20] sm:$0xff]
        %v212 = vld [vmem:[%s169 + $0x28] sm:$0xff]
        %v213 = vld [vmem:[%s169 + $0x30] sm:$0xff]
        %v214 = vld [vmem:[%s169 + $0x38] sm:$0xff]
        %v215 = vld [vmem:[%s178] sm:$0xff]
        %v216 = vld [vmem:[%s178 + $0x8] sm:$0xff]
        %v217 = vld [vmem:[%s178 + $0x10] sm:$0xff]
        %v218 = vld [vmem:[%s178 + $0x18] sm:$0xff]
        %v219 = vld [vmem:[%s178 + $0x20] sm:$0xff]
        %v220 = vld [vmem:[%s178 + $0x28] sm:$0xff]
        %v221 = vld [vmem:[%s178 + $0x30] sm:$0xff]
        %v222 = vld [vmem:[%s178 + $0x38] sm:$0xff]
        %v227 = vrot.slane %v207, 1
        %v228 = vrot.slane %v209, 1
        %v229 = vrot.slane %v211, 1
        %v230 = vrot.slane %v213, 1
        %vm239 = vcmask 1040384
        %v240 = vrot.slane %v207, 7
        %v241 = vrot.slane %v208, 7
        %v242 = vsel %vm239, %v240, %v241
        %v243 = vrot.slane %v209, 7
        %v244 = vrot.slane %v210, 7
        %v245 = vsel %vm239, %v243, %v244
        %v246 = vrot.slane %v211, 7
        %v247 = vrot.slane %v212, 7
        %v248 = vsel %vm239, %v246, %v247
        %v249 = vrot.slane %v213, 7
        %v250 = vrot.slane %v214, 7
        %v251 = vsel %vm239, %v249, %v250
        %v260 = vsel %vm239, %v227, %v240
        %v261 = vsel %vm239, %v228, %v243
        %v262 = vsel %vm239, %v229, %v246
        %v263 = vsel %vm239, %v230, %v249
        %vm264 = vcmask 1046528
        %v265 = vrot.slane %v208, 1
        %v266 = vsel %vm264, %v227, %v265
        %v267 = vrot.slane %v210, 1
        %v268 = vsel %vm264, %v228, %v267
        %v269 = vrot.slane %v212, 1
        %v270 = vsel %vm264, %v229, %v269
        %v271 = vrot.slane %v214, 1
        %v272 = vsel %vm264, %v230, %v271
        %v285 = vsel %vm264, %v265, %v241
        %v286 = vsel %vm264, %v267, %v244
        %v287 = vsel %vm264, %v269, %v247
        %v288 = vsel %vm264, %v271, %v250
        %v289 = vadd.f32 %v260, %v207
        %v290 = vadd.f32 %v242, %v208
        %v291 = vadd.f32 %v261, %v209
        %v292 = vadd.f32 %v245, %v210
        %v293 = vadd.f32 %v262, %v211
        %v294 = vadd.f32 %v248, %v212
        %v295 = vadd.f32 %v263, %v213
        %v296 = vadd.f32 %v251, %v214
        %v297 = vadd.f32 %v289, %v266
        %v298 = vadd.f32 %v290, %v285
        %v299 = vadd.f32 %v291, %v268
        %v300 = vadd.f32 %v292, %v286
        %v301 = vadd.f32 %v293, %v270
        %v302 = vadd.f32 %v294, %v287
        %v303 = vadd.f32 %v295, %v272
        %v304 = vadd.f32 %v296, %v288
        %313 = vrot.lane.b32.xlu0 %v297, 127
        %v314 = vpop.permute.xlu0 %313
        %315 = vrot.lane.b32.xlu0 %v298, 127
        %v316 = vpop.permute.xlu0 %315
        %317 = vrot.lane.b32.xlu0 %v299, 127
        %v318 = vpop.permute.xlu0 %317
        %319 = vrot.lane.b32.xlu0 %v300, 127
        %v320 = vpop.permute.xlu0 %319
        %321 = vrot.lane.b32.xlu0 %v301, 127
        %v322 = vpop.permute.xlu0 %321
        %323 = vrot.lane.b32.xlu0 %v302, 127
        %v324 = vpop.permute.xlu0 %323
        %325 = vrot.lane.b32.xlu0 %v303, 127
        %v326 = vpop.permute.xlu0 %325
        %327 = vrot.lane.b32.xlu0 %v304, 127
        %v328 = vpop.permute.xlu0 %327
        %337 = vrot.lane.b32.xlu0 %v297, 1
        %v338 = vpop.permute.xlu0 %337
        %339 = vrot.lane.b32.xlu0 %v298, 1
        %v340 = vpop.permute.xlu0 %339
        %341 = vrot.lane.b32.xlu0 %v299, 1
        %v342 = vpop.permute.xlu0 %341
        %343 = vrot.lane.b32.xlu0 %v300, 1
        %v344 = vpop.permute.xlu0 %343
        %345 = vrot.lane.b32.xlu0 %v301, 1
        %v346 = vpop.permute.xlu0 %345
        %347 = vrot.lane.b32.xlu0 %v302, 1
        %v348 = vpop.permute.xlu0 %347
        %349 = vrot.lane.b32.xlu0 %v303, 1
        %v350 = vpop.permute.xlu0 %349
        %351 = vrot.lane.b32.xlu0 %v304, 1
        %v352 = vpop.permute.xlu0 %351
        %vm361 = vcmask 7168
        %v362 = vsel %vm361, %v314, %v338
        %v363 = vsel %vm361, %v316, %v340
        %v364 = vsel %vm361, %v318, %v342
        %v365 = vsel %vm361, %v320, %v344
        %v366 = vsel %vm361, %v322, %v346
        %v367 = vsel %vm361, %v324, %v348
        %v368 = vsel %vm361, %v326, %v350
        %v369 = vsel %vm361, %v328, %v352
        %vm370 = vcmask 121856
        %v371 = vsel %vm370, %v314, %v338
        %v372 = vsel %vm370, %v316, %v340
        %v373 = vsel %vm370, %v318, %v342
        %v374 = vsel %vm370, %v320, %v344
        %v375 = vsel %vm370, %v322, %v346
        %v376 = vsel %vm370, %v324, %v348
        %v377 = vsel %vm370, %v326, %v350
        %v378 = vsel %vm370, %v328, %v352
        %v379 = vadd.f32 %v362, %v297
        %v380 = vadd.f32 %v363, %v298
        %v381 = vadd.f32 %v364, %v299
        %v382 = vadd.f32 %v365, %v300
        %v383 = vadd.f32 %v366, %v301
        %v384 = vadd.f32 %v367, %v302
        %v385 = vadd.f32 %v368, %v303
        %v386 = vadd.f32 %v369, %v304
        %v387 = vadd.f32 %v379, %v371
        %v388 = vadd.f32 %v380, %v372
        %v389 = vadd.f32 %v381, %v373
        %v390 = vadd.f32 %v382, %v374
        %v391 = vadd.f32 %v383, %v375
        %v392 = vadd.f32 %v384, %v376
        %v393 = vadd.f32 %v385, %v377
        %v394 = vadd.f32 %v386, %v378
        %v395 = vmul.f32 %v387, 0.11111111
        %v396 = vmul.f32 %v388, 0.11111111
        %v397 = vmul.f32 %v389, 0.11111111
        %v398 = vmul.f32 %v390, 0.11111111
        %v399 = vmul.f32 %v391, 0.11111111
        %v400 = vmul.f32 %v392, 0.11111111
        %v401 = vmul.f32 %v393, 0.11111111
        %v402 = vmul.f32 %v394, 0.11111111
        %v407 = vrot.slane %v215, 1
        %v408 = vrot.slane %v217, 1
        %v409 = vrot.slane %v219, 1
        %v410 = vrot.slane %v221, 1
        %v419 = vrot.slane %v215, 7
        %v420 = vrot.slane %v216, 7
        %v421 = vsel %vm239, %v419, %v420
        %v422 = vrot.slane %v217, 7
        %v423 = vrot.slane %v218, 7
        %v424 = vsel %vm239, %v422, %v423
        %v425 = vrot.slane %v219, 7
        %v426 = vrot.slane %v220, 7
        %v427 = vsel %vm239, %v425, %v426
        %v428 = vrot.slane %v221, 7
        %v429 = vrot.slane %v222, 7
        %v430 = vsel %vm239, %v428, %v429
        %v439 = vsel %vm239, %v407, %v419
        %v440 = vsel %vm239, %v408, %v422
        %v441 = vsel %vm239, %v409, %v425
        %v442 = vsel %vm239, %v410, %v428
        %v443 = vrot.slane %v216, 1
        %v444 = vsel %vm264, %v407, %v443
        %v445 = vrot.slane %v218, 1
        %v446 = vsel %vm264, %v408, %v445
        %v447 = vrot.slane %v220, 1
        %v448 = vsel %vm264, %v409, %v447
        %v449 = vrot.slane %v222, 1
        %v450 = vsel %vm264, %v410, %v449
        %v463 = vsel %vm264, %v443, %v420
        %v464 = vsel %vm264, %v445, %v423
        %v465 = vsel %vm264, %v447, %v426
        %v466 = vsel %vm264, %v449, %v429
        %v467 = vadd.f32 %v439, %v215
        %v468 = vadd.f32 %v421, %v216
        %v469 = vadd.f32 %v440, %v217
        %v470 = vadd.f32 %v424, %v218
        %v471 = vadd.f32 %v441, %v219
        %v472 = vadd.f32 %v427, %v220
        %v473 = vadd.f32 %v442, %v221
        %v474 = vadd.f32 %v430, %v222
        %v475 = vadd.f32 %v467, %v444
        %v476 = vadd.f32 %v468, %v463
        %v477 = vadd.f32 %v469, %v446
        %v478 = vadd.f32 %v470, %v464
        %v479 = vadd.f32 %v471, %v448
        %v480 = vadd.f32 %v472, %v465
        %v481 = vadd.f32 %v473, %v450
        %v482 = vadd.f32 %v474, %v466
        %491 = vrot.lane.b32.xlu0 %v475, 127
        %v492 = vpop.permute.xlu0 %491
        %493 = vrot.lane.b32.xlu0 %v476, 127
        %v494 = vpop.permute.xlu0 %493
        %495 = vrot.lane.b32.xlu0 %v477, 127
        %v496 = vpop.permute.xlu0 %495
        %497 = vrot.lane.b32.xlu0 %v478, 127
        %v498 = vpop.permute.xlu0 %497
        %499 = vrot.lane.b32.xlu0 %v479, 127
        %v500 = vpop.permute.xlu0 %499
        %501 = vrot.lane.b32.xlu0 %v480, 127
        %v502 = vpop.permute.xlu0 %501
        %503 = vrot.lane.b32.xlu0 %v481, 127
        %v504 = vpop.permute.xlu0 %503
        %505 = vrot.lane.b32.xlu0 %v482, 127
        %v506 = vpop.permute.xlu0 %505
        %515 = vrot.lane.b32.xlu0 %v475, 1
        %v516 = vpop.permute.xlu0 %515
        %517 = vrot.lane.b32.xlu0 %v476, 1
        %v518 = vpop.permute.xlu0 %517
        %519 = vrot.lane.b32.xlu0 %v477, 1
        %v520 = vpop.permute.xlu0 %519
        %521 = vrot.lane.b32.xlu0 %v478, 1
        %v522 = vpop.permute.xlu0 %521
        %523 = vrot.lane.b32.xlu0 %v479, 1
        %v524 = vpop.permute.xlu0 %523
        %525 = vrot.lane.b32.xlu0 %v480, 1
        %v526 = vpop.permute.xlu0 %525
        %527 = vrot.lane.b32.xlu0 %v481, 1
        %v528 = vpop.permute.xlu0 %527
        %529 = vrot.lane.b32.xlu0 %v482, 1
        %v530 = vpop.permute.xlu0 %529
        %v539 = vsel %vm361, %v492, %v516
        %v540 = vsel %vm361, %v494, %v518
        %v541 = vsel %vm361, %v496, %v520
        %v542 = vsel %vm361, %v498, %v522
        %v543 = vsel %vm361, %v500, %v524
        %v544 = vsel %vm361, %v502, %v526
        %v545 = vsel %vm361, %v504, %v528
        %v546 = vsel %vm361, %v506, %v530
        %v547 = vsel %vm370, %v492, %v516
        %v548 = vsel %vm370, %v494, %v518
        %v549 = vsel %vm370, %v496, %v520
        %v550 = vsel %vm370, %v498, %v522
        %v551 = vsel %vm370, %v500, %v524
        %v552 = vsel %vm370, %v502, %v526
        %v553 = vsel %vm370, %v504, %v528
        %v554 = vsel %vm370, %v506, %v530
        %v555 = vadd.f32 %v539, %v475
        %v556 = vadd.f32 %v540, %v476
        %v557 = vadd.f32 %v541, %v477
        %v558 = vadd.f32 %v542, %v478
        %v559 = vadd.f32 %v543, %v479
        %v560 = vadd.f32 %v544, %v480
        %v561 = vadd.f32 %v545, %v481
        %v562 = vadd.f32 %v546, %v482
        %v563 = vadd.f32 %v555, %v547
        %v564 = vadd.f32 %v556, %v548
        %v565 = vadd.f32 %v557, %v549
        %v566 = vadd.f32 %v558, %v550
        %v567 = vadd.f32 %v559, %v551
        %v568 = vadd.f32 %v560, %v552
        %v569 = vadd.f32 %v561, %v553
        %v570 = vadd.f32 %v562, %v554
        %v571 = vmul.f32 %v563, 0.11111111
        %v572 = vmul.f32 %v564, 0.11111111
        %v573 = vmul.f32 %v565, 0.11111111
        %v574 = vmul.f32 %v566, 0.11111111
        %v575 = vmul.f32 %v567, 0.11111111
        %v576 = vmul.f32 %v568, 0.11111111
        %v577 = vmul.f32 %v569, 0.11111111
        %v578 = vmul.f32 %v570, 0.11111111
        %v579 = vmul.f32 %v207, %v207
        %v580 = vmul.f32 %v208, %v208
        %v581 = vmul.f32 %v209, %v209
        %v582 = vmul.f32 %v210, %v210
        %v583 = vmul.f32 %v211, %v211
        %v584 = vmul.f32 %v212, %v212
        %v585 = vmul.f32 %v213, %v213
        %v586 = vmul.f32 %v214, %v214
        %v591 = vrot.slane %v579, 1
        %v592 = vrot.slane %v581, 1
        %v593 = vrot.slane %v583, 1
        %v594 = vrot.slane %v585, 1
        %v603 = vrot.slane %v579, 7
        %v604 = vrot.slane %v580, 7
        %v605 = vsel %vm239, %v603, %v604
        %v606 = vrot.slane %v581, 7
        %v607 = vrot.slane %v582, 7
        %v608 = vsel %vm239, %v606, %v607
        %v609 = vrot.slane %v583, 7
        %v610 = vrot.slane %v584, 7
        %v611 = vsel %vm239, %v609, %v610
        %v612 = vrot.slane %v585, 7
        %v613 = vrot.slane %v586, 7
        %v614 = vsel %vm239, %v612, %v613
        %v623 = vsel %vm239, %v591, %v603
        %v624 = vsel %vm239, %v592, %v606
        %v625 = vsel %vm239, %v593, %v609
        %v626 = vsel %vm239, %v594, %v612
        %v627 = vrot.slane %v580, 1
        %v628 = vsel %vm264, %v591, %v627
        %v629 = vrot.slane %v582, 1
        %v630 = vsel %vm264, %v592, %v629
        %v631 = vrot.slane %v584, 1
        %v632 = vsel %vm264, %v593, %v631
        %v633 = vrot.slane %v586, 1
        %v634 = vsel %vm264, %v594, %v633
        %v647 = vsel %vm264, %v627, %v604
        %v648 = vsel %vm264, %v629, %v607
        %v649 = vsel %vm264, %v631, %v610
        %v650 = vsel %vm264, %v633, %v613
        %v651 = vadd.f32 %v623, %v579
        %v652 = vadd.f32 %v605, %v580
        %v653 = vadd.f32 %v624, %v581
        %v654 = vadd.f32 %v608, %v582
        %v655 = vadd.f32 %v625, %v583
        %v656 = vadd.f32 %v611, %v584
        %v657 = vadd.f32 %v626, %v585
        %v658 = vadd.f32 %v614, %v586
        %v659 = vadd.f32 %v651, %v628
        %v660 = vadd.f32 %v652, %v647
        %v661 = vadd.f32 %v653, %v630
        %v662 = vadd.f32 %v654, %v648
        %v663 = vadd.f32 %v655, %v632
        %v664 = vadd.f32 %v656, %v649
        %v665 = vadd.f32 %v657, %v634
        %v666 = vadd.f32 %v658, %v650
        %675 = vrot.lane.b32.xlu0 %v659, 127
        %v676 = vpop.permute.xlu0 %675
        %677 = vrot.lane.b32.xlu0 %v660, 127
        %v678 = vpop.permute.xlu0 %677
        %679 = vrot.lane.b32.xlu0 %v661, 127
        %v680 = vpop.permute.xlu0 %679
        %681 = vrot.lane.b32.xlu0 %v662, 127
        %v682 = vpop.permute.xlu0 %681
        %683 = vrot.lane.b32.xlu0 %v663, 127
        %v684 = vpop.permute.xlu0 %683
        %685 = vrot.lane.b32.xlu0 %v664, 127
        %v686 = vpop.permute.xlu0 %685
        %687 = vrot.lane.b32.xlu0 %v665, 127
        %v688 = vpop.permute.xlu0 %687
        %689 = vrot.lane.b32.xlu0 %v666, 127
        %v690 = vpop.permute.xlu0 %689
        %699 = vrot.lane.b32.xlu0 %v659, 1
        %v700 = vpop.permute.xlu0 %699
        %701 = vrot.lane.b32.xlu0 %v660, 1
        %v702 = vpop.permute.xlu0 %701
        %703 = vrot.lane.b32.xlu0 %v661, 1
        %v704 = vpop.permute.xlu0 %703
        %705 = vrot.lane.b32.xlu0 %v662, 1
        %v706 = vpop.permute.xlu0 %705
        %707 = vrot.lane.b32.xlu0 %v663, 1
        %v708 = vpop.permute.xlu0 %707
        %709 = vrot.lane.b32.xlu0 %v664, 1
        %v710 = vpop.permute.xlu0 %709
        %711 = vrot.lane.b32.xlu0 %v665, 1
        %v712 = vpop.permute.xlu0 %711
        %713 = vrot.lane.b32.xlu0 %v666, 1
        %v714 = vpop.permute.xlu0 %713
        %v723 = vsel %vm361, %v676, %v700
        %v724 = vsel %vm361, %v678, %v702
        %v725 = vsel %vm361, %v680, %v704
        %v726 = vsel %vm361, %v682, %v706
        %v727 = vsel %vm361, %v684, %v708
        %v728 = vsel %vm361, %v686, %v710
        %v729 = vsel %vm361, %v688, %v712
        %v730 = vsel %vm361, %v690, %v714
        %v731 = vsel %vm370, %v676, %v700
        %v732 = vsel %vm370, %v678, %v702
        %v733 = vsel %vm370, %v680, %v704
        %v734 = vsel %vm370, %v682, %v706
        %v735 = vsel %vm370, %v684, %v708
        %v736 = vsel %vm370, %v686, %v710
        %v737 = vsel %vm370, %v688, %v712
        %v738 = vsel %vm370, %v690, %v714
        %v739 = vadd.f32 %v723, %v659
        %v740 = vadd.f32 %v724, %v660
        %v741 = vadd.f32 %v725, %v661
        %v742 = vadd.f32 %v726, %v662
        %v743 = vadd.f32 %v727, %v663
        %v744 = vadd.f32 %v728, %v664
        %v745 = vadd.f32 %v729, %v665
        %v746 = vadd.f32 %v730, %v666
        %v747 = vadd.f32 %v739, %v731
        %v748 = vadd.f32 %v740, %v732
        %v749 = vadd.f32 %v741, %v733
        %v750 = vadd.f32 %v742, %v734
        %v751 = vadd.f32 %v743, %v735
        %v752 = vadd.f32 %v744, %v736
        %v753 = vadd.f32 %v745, %v737
        %v754 = vadd.f32 %v746, %v738
        %v755 = vmul.f32 %v747, 0.11111111
        %v756 = vmul.f32 %v748, 0.11111111
        %v757 = vmul.f32 %v749, 0.11111111
        %v758 = vmul.f32 %v750, 0.11111111
        %v759 = vmul.f32 %v751, 0.11111111
        %v760 = vmul.f32 %v752, 0.11111111
        %v761 = vmul.f32 %v753, 0.11111111
        %v762 = vmul.f32 %v754, 0.11111111
        %v763 = vmul.f32 %v215, %v215
        %v764 = vmul.f32 %v216, %v216
        %v765 = vmul.f32 %v217, %v217
        %v766 = vmul.f32 %v218, %v218
        %v767 = vmul.f32 %v219, %v219
        %v768 = vmul.f32 %v220, %v220
        %v769 = vmul.f32 %v221, %v221
        %v770 = vmul.f32 %v222, %v222
        %v775 = vrot.slane %v763, 1
        %v776 = vrot.slane %v765, 1
        %v777 = vrot.slane %v767, 1
        %v778 = vrot.slane %v769, 1
        %v787 = vrot.slane %v763, 7
        %v788 = vrot.slane %v764, 7
        %v789 = vsel %vm239, %v787, %v788
        %v790 = vrot.slane %v765, 7
        %v791 = vrot.slane %v766, 7
        %v792 = vsel %vm239, %v790, %v791
        %v793 = vrot.slane %v767, 7
        %v794 = vrot.slane %v768, 7
        %v795 = vsel %vm239, %v793, %v794
        %v796 = vrot.slane %v769, 7
        %v797 = vrot.slane %v770, 7
        %v798 = vsel %vm239, %v796, %v797
        %v807 = vsel %vm239, %v775, %v787
        %v808 = vsel %vm239, %v776, %v790
        %v809 = vsel %vm239, %v777, %v793
        %v810 = vsel %vm239, %v778, %v796
        %v811 = vrot.slane %v764, 1
        %v812 = vsel %vm264, %v775, %v811
        %v813 = vrot.slane %v766, 1
        %v814 = vsel %vm264, %v776, %v813
        %v815 = vrot.slane %v768, 1
        %v816 = vsel %vm264, %v777, %v815
        %v817 = vrot.slane %v770, 1
        %v818 = vsel %vm264, %v778, %v817
        %v831 = vsel %vm264, %v811, %v788
        %v832 = vsel %vm264, %v813, %v791
        %v833 = vsel %vm264, %v815, %v794
        %v834 = vsel %vm264, %v817, %v797
        %v835 = vadd.f32 %v807, %v763
        %v836 = vadd.f32 %v789, %v764
        %v837 = vadd.f32 %v808, %v765
        %v838 = vadd.f32 %v792, %v766
        %v839 = vadd.f32 %v809, %v767
        %v840 = vadd.f32 %v795, %v768
        %v841 = vadd.f32 %v810, %v769
        %v842 = vadd.f32 %v798, %v770
        %v843 = vadd.f32 %v835, %v812
        %v844 = vadd.f32 %v836, %v831
        %v845 = vadd.f32 %v837, %v814
        %v846 = vadd.f32 %v838, %v832
        %v847 = vadd.f32 %v839, %v816
        %v848 = vadd.f32 %v840, %v833
        %v849 = vadd.f32 %v841, %v818
        %v850 = vadd.f32 %v842, %v834
        %859 = vrot.lane.b32.xlu0 %v843, 127
        %v860 = vpop.permute.xlu0 %859
        %861 = vrot.lane.b32.xlu0 %v844, 127
        %v862 = vpop.permute.xlu0 %861
        %863 = vrot.lane.b32.xlu0 %v845, 127
        %v864 = vpop.permute.xlu0 %863
        %865 = vrot.lane.b32.xlu0 %v846, 127
        %v866 = vpop.permute.xlu0 %865
        %867 = vrot.lane.b32.xlu0 %v847, 127
        %v868 = vpop.permute.xlu0 %867
        %869 = vrot.lane.b32.xlu0 %v848, 127
        %v870 = vpop.permute.xlu0 %869
        %871 = vrot.lane.b32.xlu0 %v849, 127
        %v872 = vpop.permute.xlu0 %871
        %873 = vrot.lane.b32.xlu0 %v850, 127
        %v874 = vpop.permute.xlu0 %873
        %883 = vrot.lane.b32.xlu0 %v843, 1
        %v884 = vpop.permute.xlu0 %883
        %885 = vrot.lane.b32.xlu0 %v844, 1
        %v886 = vpop.permute.xlu0 %885
        %887 = vrot.lane.b32.xlu0 %v845, 1
        %v888 = vpop.permute.xlu0 %887
        %889 = vrot.lane.b32.xlu0 %v846, 1
        %v890 = vpop.permute.xlu0 %889
        %891 = vrot.lane.b32.xlu0 %v847, 1
        %v892 = vpop.permute.xlu0 %891
        %893 = vrot.lane.b32.xlu0 %v848, 1
        %v894 = vpop.permute.xlu0 %893
        %895 = vrot.lane.b32.xlu0 %v849, 1
        %v896 = vpop.permute.xlu0 %895
        %897 = vrot.lane.b32.xlu0 %v850, 1
        %v898 = vpop.permute.xlu0 %897
        %v907 = vsel %vm361, %v860, %v884
        %v908 = vsel %vm361, %v862, %v886
        %v909 = vsel %vm361, %v864, %v888
        %v910 = vsel %vm361, %v866, %v890
        %v911 = vsel %vm361, %v868, %v892
        %v912 = vsel %vm361, %v870, %v894
        %v913 = vsel %vm361, %v872, %v896
        %v914 = vsel %vm361, %v874, %v898
        %v915 = vsel %vm370, %v860, %v884
        %v916 = vsel %vm370, %v862, %v886
        %v917 = vsel %vm370, %v864, %v888
        %v918 = vsel %vm370, %v866, %v890
        %v919 = vsel %vm370, %v868, %v892
        %v920 = vsel %vm370, %v870, %v894
        %v921 = vsel %vm370, %v872, %v896
        %v922 = vsel %vm370, %v874, %v898
        %v923 = vadd.f32 %v907, %v843
        %v924 = vadd.f32 %v908, %v844
        %v925 = vadd.f32 %v909, %v845
        %v926 = vadd.f32 %v910, %v846
        %v927 = vadd.f32 %v911, %v847
        %v928 = vadd.f32 %v912, %v848
        %v929 = vadd.f32 %v913, %v849
        %v930 = vadd.f32 %v914, %v850
        %v931 = vadd.f32 %v923, %v915
        %v932 = vadd.f32 %v924, %v916
        %v933 = vadd.f32 %v925, %v917
        %v934 = vadd.f32 %v926, %v918
        %v935 = vadd.f32 %v927, %v919
        %v936 = vadd.f32 %v928, %v920
        %v937 = vadd.f32 %v929, %v921
        %v938 = vadd.f32 %v930, %v922
        %v939 = vmul.f32 %v931, 0.11111111
        %v940 = vmul.f32 %v932, 0.11111111
        %v941 = vmul.f32 %v933, 0.11111111
        %v942 = vmul.f32 %v934, 0.11111111
        %v943 = vmul.f32 %v935, 0.11111111
        %v944 = vmul.f32 %v936, 0.11111111
        %v945 = vmul.f32 %v937, 0.11111111
        %v946 = vmul.f32 %v938, 0.11111111
        %v947 = vmul.f32 %v207, %v215
        %v948 = vmul.f32 %v208, %v216
        %v949 = vmul.f32 %v209, %v217
        %v950 = vmul.f32 %v210, %v218
        %v951 = vmul.f32 %v211, %v219
        %v952 = vmul.f32 %v212, %v220
        %v953 = vmul.f32 %v213, %v221
        %v954 = vmul.f32 %v214, %v222
        %v959 = vrot.slane %v947, 1
        %v960 = vrot.slane %v949, 1
        %v961 = vrot.slane %v951, 1
        %v962 = vrot.slane %v953, 1
        %v971 = vrot.slane %v947, 7
        %v972 = vrot.slane %v948, 7
        %v973 = vsel %vm239, %v971, %v972
        %v974 = vrot.slane %v949, 7
        %v975 = vrot.slane %v950, 7
        %v976 = vsel %vm239, %v974, %v975
        %v977 = vrot.slane %v951, 7
        %v978 = vrot.slane %v952, 7
        %v979 = vsel %vm239, %v977, %v978
        %v980 = vrot.slane %v953, 7
        %v981 = vrot.slane %v954, 7
        %v982 = vsel %vm239, %v980, %v981
        %v991 = vsel %vm239, %v959, %v971
        %v992 = vsel %vm239, %v960, %v974
        %v993 = vsel %vm239, %v961, %v977
        %v994 = vsel %vm239, %v962, %v980
        %v995 = vrot.slane %v948, 1
        %v996 = vsel %vm264, %v959, %v995
        %v997 = vrot.slane %v950, 1
        %v998 = vsel %vm264, %v960, %v997
        %v999 = vrot.slane %v952, 1
        %v1000 = vsel %vm264, %v961, %v999
        %v1001 = vrot.slane %v954, 1
        %v1002 = vsel %vm264, %v962, %v1001
        %v1015 = vsel %vm264, %v995, %v972
        %v1016 = vsel %vm264, %v997, %v975
        %v1017 = vsel %vm264, %v999, %v978
        %v1018 = vsel %vm264, %v1001, %v981
        %v1019 = vadd.f32 %v991, %v947
        %v1020 = vadd.f32 %v973, %v948
        %v1021 = vadd.f32 %v992, %v949
        %v1022 = vadd.f32 %v976, %v950
        %v1023 = vadd.f32 %v993, %v951
        %v1024 = vadd.f32 %v979, %v952
        %v1025 = vadd.f32 %v994, %v953
        %v1026 = vadd.f32 %v982, %v954
        %v1027 = vadd.f32 %v1019, %v996
        %v1028 = vadd.f32 %v1020, %v1015
        %v1029 = vadd.f32 %v1021, %v998
        %v1030 = vadd.f32 %v1022, %v1016
        %v1031 = vadd.f32 %v1023, %v1000
        %v1032 = vadd.f32 %v1024, %v1017
        %v1033 = vadd.f32 %v1025, %v1002
        %v1034 = vadd.f32 %v1026, %v1018
        %1043 = vrot.lane.b32.xlu0 %v1027, 127
        %v1044 = vpop.permute.xlu0 %1043
        %1045 = vrot.lane.b32.xlu0 %v1028, 127
        %v1046 = vpop.permute.xlu0 %1045
        %1047 = vrot.lane.b32.xlu0 %v1029, 127
        %v1048 = vpop.permute.xlu0 %1047
        %1049 = vrot.lane.b32.xlu0 %v1030, 127
        %v1050 = vpop.permute.xlu0 %1049
        %1051 = vrot.lane.b32.xlu0 %v1031, 127
        %v1052 = vpop.permute.xlu0 %1051
        %1053 = vrot.lane.b32.xlu0 %v1032, 127
        %v1054 = vpop.permute.xlu0 %1053
        %1055 = vrot.lane.b32.xlu0 %v1033, 127
        %v1056 = vpop.permute.xlu0 %1055
        %1057 = vrot.lane.b32.xlu0 %v1034, 127
        %v1058 = vpop.permute.xlu0 %1057
        %1067 = vrot.lane.b32.xlu0 %v1027, 1
        %v1068 = vpop.permute.xlu0 %1067
        %1069 = vrot.lane.b32.xlu0 %v1028, 1
        %v1070 = vpop.permute.xlu0 %1069
        %1071 = vrot.lane.b32.xlu0 %v1029, 1
        %v1072 = vpop.permute.xlu0 %1071
        %1073 = vrot.lane.b32.xlu0 %v1030, 1
        %v1074 = vpop.permute.xlu0 %1073
        %1075 = vrot.lane.b32.xlu0 %v1031, 1
        %v1076 = vpop.permute.xlu0 %1075
        %1077 = vrot.lane.b32.xlu0 %v1032, 1
        %v1078 = vpop.permute.xlu0 %1077
        %1079 = vrot.lane.b32.xlu0 %v1033, 1
        %v1080 = vpop.permute.xlu0 %1079
        %1081 = vrot.lane.b32.xlu0 %v1034, 1
        %v1082 = vpop.permute.xlu0 %1081
        %v1091 = vsel %vm361, %v1044, %v1068
        %v1092 = vsel %vm361, %v1046, %v1070
        %v1093 = vsel %vm361, %v1048, %v1072
        %v1094 = vsel %vm361, %v1050, %v1074
        %v1095 = vsel %vm361, %v1052, %v1076
        %v1096 = vsel %vm361, %v1054, %v1078
        %v1097 = vsel %vm361, %v1056, %v1080
        %v1098 = vsel %vm361, %v1058, %v1082
        %v1099 = vsel %vm370, %v1044, %v1068
        %v1100 = vsel %vm370, %v1046, %v1070
        %v1101 = vsel %vm370, %v1048, %v1072
        %v1102 = vsel %vm370, %v1050, %v1074
        %v1103 = vsel %vm370, %v1052, %v1076
        %v1104 = vsel %vm370, %v1054, %v1078
        %v1105 = vsel %vm370, %v1056, %v1080
        %v1106 = vsel %vm370, %v1058, %v1082
        %v1107 = vadd.f32 %v1091, %v1027
        %v1108 = vadd.f32 %v1092, %v1028
        %v1109 = vadd.f32 %v1093, %v1029
        %v1110 = vadd.f32 %v1094, %v1030
        %v1111 = vadd.f32 %v1095, %v1031
        %v1112 = vadd.f32 %v1096, %v1032
        %v1113 = vadd.f32 %v1097, %v1033
        %v1114 = vadd.f32 %v1098, %v1034
        %v1115 = vadd.f32 %v1107, %v1099
        %v1116 = vadd.f32 %v1108, %v1100
        %v1117 = vadd.f32 %v1109, %v1101
        %v1118 = vadd.f32 %v1110, %v1102
        %v1119 = vadd.f32 %v1111, %v1103
        %v1120 = vadd.f32 %v1112, %v1104
        %v1121 = vadd.f32 %v1113, %v1105
        %v1122 = vadd.f32 %v1114, %v1106
        %v1123 = vmul.f32 %v1115, 0.11111111
        %v1124 = vmul.f32 %v1116, 0.11111111
        %v1125 = vmul.f32 %v1117, 0.11111111
        %v1126 = vmul.f32 %v1118, 0.11111111
        %v1127 = vmul.f32 %v1119, 0.11111111
        %v1128 = vmul.f32 %v1120, 0.11111111
        %v1129 = vmul.f32 %v1121, 0.11111111
        %v1130 = vmul.f32 %v1122, 0.11111111
        %v1131 = vmul.f32 %v395, %v395
        %v1132 = vmul.f32 %v396, %v396
        %v1133 = vmul.f32 %v397, %v397
        %v1134 = vmul.f32 %v398, %v398
        %v1135 = vmul.f32 %v399, %v399
        %v1136 = vmul.f32 %v400, %v400
        %v1137 = vmul.f32 %v401, %v401
        %v1138 = vmul.f32 %v402, %v402
        %v1139 = vmul.f32 %v571, %v571
        %v1140 = vmul.f32 %v572, %v572
        %v1141 = vmul.f32 %v573, %v573
        %v1142 = vmul.f32 %v574, %v574
        %v1143 = vmul.f32 %v575, %v575
        %v1144 = vmul.f32 %v576, %v576
        %v1145 = vmul.f32 %v577, %v577
        %v1146 = vmul.f32 %v578, %v578
        %v1147 = vmul.f32 %v395, %v571
        %v1148 = vmul.f32 %v396, %v572
        %v1149 = vmul.f32 %v397, %v573
        %v1150 = vmul.f32 %v398, %v574
        %v1151 = vmul.f32 %v399, %v575
        %v1152 = vmul.f32 %v400, %v576
        %v1153 = vmul.f32 %v401, %v577
        %v1154 = vmul.f32 %v402, %v578
        %v1155 = vsub.f32 %v755, %v1131
        %v1156 = vsub.f32 %v756, %v1132
        %v1157 = vsub.f32 %v757, %v1133
        %v1158 = vsub.f32 %v758, %v1134
        %v1159 = vsub.f32 %v759, %v1135
        %v1160 = vsub.f32 %v760, %v1136
        %v1161 = vsub.f32 %v761, %v1137
        %v1162 = vsub.f32 %v762, %v1138
        %v1163 = vsub.f32 %v939, %v1139
        %v1164 = vsub.f32 %v940, %v1140
        %v1165 = vsub.f32 %v941, %v1141
        %v1166 = vsub.f32 %v942, %v1142
        %v1167 = vsub.f32 %v943, %v1143
        %v1168 = vsub.f32 %v944, %v1144
        %v1169 = vsub.f32 %v945, %v1145
        %v1170 = vsub.f32 %v946, %v1146
        %v1171 = vsub.f32 %v1123, %v1147
        %v1172 = vsub.f32 %v1124, %v1148
        %v1173 = vsub.f32 %v1125, %v1149
        %v1174 = vsub.f32 %v1126, %v1150
        %v1175 = vsub.f32 %v1127, %v1151
        %v1176 = vsub.f32 %v1128, %v1152
        %v1177 = vsub.f32 %v1129, %v1153
        %v1178 = vsub.f32 %v1130, %v1154
        %v1179 = vmul.f32 %v1147, 2.0
        %v1180 = vmul.f32 %v1148, 2.0
        %v1181 = vmul.f32 %v1149, 2.0
        %v1182 = vmul.f32 %v1150, 2.0
        %v1183 = vmul.f32 %v1151, 2.0
        %v1184 = vmul.f32 %v1152, 2.0
        %v1185 = vmul.f32 %v1153, 2.0
        %v1186 = vmul.f32 %v1154, 2.0
        %v1187 = vadd.f32 %v1179, 0.0001
        %v1188 = vadd.f32 %v1180, 0.0001
        %v1189 = vadd.f32 %v1181, 0.0001
        %v1190 = vadd.f32 %v1182, 0.0001
        %v1191 = vadd.f32 %v1183, 0.0001
        %v1192 = vadd.f32 %v1184, 0.0001
        %v1193 = vadd.f32 %v1185, 0.0001
        %v1194 = vadd.f32 %v1186, 0.0001
        %v1195 = vmul.f32 %v1171, 2.0
        %v1196 = vmul.f32 %v1172, 2.0
        %v1197 = vmul.f32 %v1173, 2.0
        %v1198 = vmul.f32 %v1174, 2.0
        %v1199 = vmul.f32 %v1175, 2.0
        %v1200 = vmul.f32 %v1176, 2.0
        %v1201 = vmul.f32 %v1177, 2.0
        %v1202 = vmul.f32 %v1178, 2.0
        %v1203 = vadd.f32 %v1195, 0.0009
        %v1204 = vadd.f32 %v1196, 0.0009
        %v1205 = vadd.f32 %v1197, 0.0009
        %v1206 = vadd.f32 %v1198, 0.0009
        %v1207 = vadd.f32 %v1199, 0.0009
        %v1208 = vadd.f32 %v1200, 0.0009
        %v1209 = vadd.f32 %v1201, 0.0009
        %v1210 = vadd.f32 %v1202, 0.0009
        %v1211 = vmul.f32 %v1187, %v1203
        %v1212 = vmul.f32 %v1188, %v1204
        %v1213 = vmul.f32 %v1189, %v1205
        %v1214 = vmul.f32 %v1190, %v1206
        %v1215 = vmul.f32 %v1191, %v1207
        %v1216 = vmul.f32 %v1192, %v1208
        %v1217 = vmul.f32 %v1193, %v1209
        %v1218 = vmul.f32 %v1194, %v1210
        %v1219 = vadd.f32 %v1131, %v1139
        %v1220 = vadd.f32 %v1132, %v1140
        %v1221 = vadd.f32 %v1133, %v1141
        %v1222 = vadd.f32 %v1134, %v1142
        %v1223 = vadd.f32 %v1135, %v1143
        %v1224 = vadd.f32 %v1136, %v1144
        %v1225 = vadd.f32 %v1137, %v1145
        %v1226 = vadd.f32 %v1138, %v1146
        %v1227 = vadd.f32 %v1219, 0.0001
        %v1228 = vadd.f32 %v1220, 0.0001
        %v1229 = vadd.f32 %v1221, 0.0001
        %v1230 = vadd.f32 %v1222, 0.0001
        %v1231 = vadd.f32 %v1223, 0.0001
        %v1232 = vadd.f32 %v1224, 0.0001
        %v1233 = vadd.f32 %v1225, 0.0001
        %v1234 = vadd.f32 %v1226, 0.0001
        %v1235 = vadd.f32 %v1155, %v1163
        %v1236 = vadd.f32 %v1156, %v1164
        %v1237 = vadd.f32 %v1157, %v1165
        %v1238 = vadd.f32 %v1158, %v1166
        %v1239 = vadd.f32 %v1159, %v1167
        %v1240 = vadd.f32 %v1160, %v1168
        %v1241 = vadd.f32 %v1161, %v1169
        %v1242 = vadd.f32 %v1162, %v1170
        %v1243 = vadd.f32 %v1235, 0.0009
        %v1244 = vadd.f32 %v1236, 0.0009
        %v1245 = vadd.f32 %v1237, 0.0009
        %v1246 = vadd.f32 %v1238, 0.0009
        %v1247 = vadd.f32 %v1239, 0.0009
        %v1248 = vadd.f32 %v1240, 0.0009
        %v1249 = vadd.f32 %v1241, 0.0009
        %v1250 = vadd.f32 %v1242, 0.0009
        %v1251 = vmul.f32 %v1227, %v1243
        %v1252 = vmul.f32 %v1228, %v1244
        %v1253 = vmul.f32 %v1229, %v1245
        %v1254 = vmul.f32 %v1230, %v1246
        %v1255 = vmul.f32 %v1231, %v1247
        %v1256 = vmul.f32 %v1232, %v1248
        %v1257 = vmul.f32 %v1233, %v1249
        %v1258 = vmul.f32 %v1234, %v1250
        %v1259 = vrcp.pop %v1251
        %v1260 = vrcp.pop %v1252
        %v1261 = vrcp.pop %v1253
        %v1262 = vrcp.pop %v1254
        %v1263 = vrcp.pop %v1255
        %v1264 = vrcp.pop %v1256
        %v1265 = vrcp.pop %v1257
        %v1266 = vrcp.pop %v1258
        %v1267 = vmul.f32 %v1211, %v1259
        %v1268 = vmul.f32 %v1212, %v1260
        %v1269 = vmul.f32 %v1213, %v1261
        %v1270 = vmul.f32 %v1214, %v1262
        %v1271 = vmul.f32 %v1215, %v1263
        %v1272 = vmul.f32 %v1216, %v1264
        %v1273 = vmul.f32 %v1217, %v1265
        %v1274 = vmul.f32 %v1218, %v1266
        %v1275 = vsub.f32 1.0, %v1267
        %v1276 = vsub.f32 1.0, %v1268
        %v1277 = vsub.f32 1.0, %v1269
        %v1278 = vsub.f32 1.0, %v1270
        %v1279 = vsub.f32 1.0, %v1271
        %v1280 = vsub.f32 1.0, %v1272
        %v1281 = vsub.f32 1.0, %v1273
        %v1282 = vsub.f32 1.0, %v1274
        %v1283 = vmul.f32 %v1275, 0.5
        %v1284 = vmul.f32 %v1276, 0.5
        %v1285 = vmul.f32 %v1277, 0.5
        %v1286 = vmul.f32 %v1278, 0.5
        %v1287 = vmul.f32 %v1279, 0.5
        %v1288 = vmul.f32 %v1280, 0.5
        %v1289 = vmul.f32 %v1281, 0.5
        %v1290 = vmul.f32 %v1282, 0.5
        %v1291 = vmax.f32 %v1283, 0.0
        %v1292 = vmax.f32 %v1284, 0.0
        %v1293 = vmax.f32 %v1285, 0.0
        %v1294 = vmax.f32 %v1286, 0.0
        %v1295 = vmax.f32 %v1287, 0.0
        %v1296 = vmax.f32 %v1288, 0.0
        %v1297 = vmax.f32 %v1289, 0.0
        %v1298 = vmax.f32 %v1290, 0.0
        %v1299 = vmin.f32 %v1291, 1.0
        %v1300 = vmin.f32 %v1292, 1.0
        %v1301 = vmin.f32 %v1293, 1.0
        %v1302 = vmin.f32 %v1294, 1.0
        %v1303 = vmin.f32 %v1295, 1.0
        %v1304 = vmin.f32 %v1296, 1.0
        %v1305 = vmin.f32 %v1297, 1.0
        %v1306 = vmin.f32 %v1298, 1.0
        %vm1307 = vcmask 130048
        %1308 = vst.msk [vmem:[%s203] sm:$0xff] %vm1307, %v1299
        %1309 = vst.msk [vmem:[%s203 + $0x8] sm:$0xff] %vm1307, %v1300
        %1310 = vst.msk [vmem:[%s203 + $0x10] sm:$0xff] %vm1307, %v1301
        %1311 = vst.msk [vmem:[%s203 + $0x18] sm:$0xff] %vm1307, %v1302
        %1312 = vst.msk [vmem:[%s203 + $0x20] sm:$0xff] %vm1307, %v1303
        %1313 = vst.msk [vmem:[%s203 + $0x28] sm:$0xff] %vm1307, %v1304
        %1314 = vst.msk [vmem:[%s203 + $0x30] sm:$0xff] %vm1307, %v1305
        %1315 = vst.msk [vmem:[%s203 + $0x38] sm:$0xff] %vm1307, %v1306
        %s1316 = sand.u32 %s82, 1
        %s1317 = scalar_lea.sflag [#allocation4], %s1316
        %s1318 = sand.u32 %s82, 1
        %s1319 = smul.addr %s1318, 64
        %s1320 = scalar_lea.vmem [#allocation7], %s1319
        // Predicated region
        $region37: #{ssim_pallas.1} parent=27 // pred_check
          %p1321 = pneg %p92
        $region38: #{ssim_pallas.1} parent=27 // pred_check_branch
          %1323 = sbr.rel (%p1321) target = $region40
        $region39: #{ssim_pallas.1} parent=27 // pred_region
          %s1324 = smul.u32 4, %s22
          %s1326 = ssub.s32 1024, 1024
          %1327 = vsyncadd %s1317, %s1326
          %s1328 = smul.addr %s1324, 2
          %s1329 = smul.addr %s1328, 128
          %s1330 = scalar_lea.hbm %s2, %s1329
          %s1331 = sshll.u32 %s1320, 4
          %s1332 = int_to_ptr.vmem [resolvable:$true] %s1331
          %1337 = dma.vmem_to_hbm [thread:$0]  %s1332, 1024, %s1330, %s1317, 128, 128, 8
        $region40: #{ssim_pallas.1} parent=27 // pred_fallthru
          _
      $region28: #{ssim_pallas.1} parent=5 // pred_fallthru
        _
      %p1338 = scmp.le.s32.totalorder 2, %s17
      // Predicated region
      $region41: #{ssim_pallas.1} parent=5 // pred_check
        %p1339 = pneg %p1338
      $region42: #{ssim_pallas.1} parent=5 // pred_check_branch
        %1341 = sbr.rel (%p1339) target = $region44
      $region43: #{ssim_pallas.1} parent=5 // pred_region
        %s1342 = ssub.s32 %s17, 2
        // Predicated region
        $region45: #{ssim_pallas.1} parent=43 // pred_check
          %p1343 = pneg %p98
        $region46: #{ssim_pallas.1} parent=43 // pred_check_branch
          %1345 = sbr.rel (%p1343) target = $region48
        $region47: #{ssim_pallas.1} parent=43 // pred_region
          %s1346 = sand.u32 %s83, 1
          %s1347 = scalar_lea.sflag [#allocation4], %s1346
          %s1348 = sand.u32 %s83, 1
          %s1349 = smul.addr %s1348, 64
          %s1350 = scalar_lea.vmem [#allocation7], %s1349
          %1351 = dma.done %s1347, 1024
        $region48: #{ssim_pallas.1} parent=43 // pred_fallthru
          _
      $region44: #{ssim_pallas.1} parent=5 // pred_fallthru
        _
    $region6: #{ssim_pallas.1} parent=1 // loop_footer
      %s21 = sadd.s32 1, %s17
    $region7: #{ssim_pallas.1} parent=1 // loop_footer_branch
      %16 = sbr.rel target = $region3
    $region8: #{ssim_pallas.1} parent=1 // loop_exit
      _
    %1352 = vsyncpa [#allocation3], 1
    %s1353 = scalar_lea.sflag [#allocation3], 1
    %1354 = vsyncpa %s1353, 1
    %1355 = vsyncpa [#allocation6], 1
    %s1356 = scalar_lea.sflag [#allocation6], 1
    %1357 = vsyncpa %s1356, 1
    %1358 = vsyncpa [#allocation4], 1
    %s1359 = scalar_lea.sflag [#allocation4], 1
    %1360 = vsyncpa %s1359, 1

</llo_original>
